<compile_context>
chip_gen: v7x
topology: tpu7x:2x2x1
jax: 0.10.0
libtpu: 0.0.40
codegen_flags: <defaults>
</compile_context>

<pallas_src>
import functools

import jax
import jax.numpy as jnp
from jax import lax
from jax.experimental import pallas as pl
from jax.experimental.pallas import tpu as pltpu

IN, HID, OUT = 4, 64, 2
IN_PAD = 8      # f32 sublane tile for the streamed x blocks
OUT_PAD = 16    # one full bf16 row-tile for the fc3 weight segment

# Row offsets inside the packed parameter slabs.  Every segment starts on a
# 16-row boundary so every static slice of the bf16 weight slab is tile-aligned
# (bf16 packs 2 logical rows per physical sublane -> 16-row tiles).
W2_R, W3_R, W1_R = 0, 64, 80
SLAB_ROWS, SLAB_COLS = 144, 64


def policy_kernel(x_ref, w_ref, b_ref, o_ref, *, batch: int, tb: int):
    """One grid step: fc1/fc2/fc3 on a (IN_PAD, tb) block of states (feature-
    major, batch on lanes).  Raw logits are stashed in the resident output
    block; the dim=0 (batch) softmax is done once on the last step."""
    j = pl.program_id(0)

    # Streamed activations block (cast to bf16 for the MXU; f32 accumulate).
    xb = x_ref[...].astype(jnp.bfloat16)                      # (IN_PAD, tb)

    # Static, tile-aligned views of the resident parameter slabs.
    w1 = w_ref[W1_R:W1_R + HID, 0:IN_PAD]                     # (64, 8)  bf16
    w2 = w_ref[W2_R:W2_R + HID, :]                            # (64, 64) bf16
    w3 = w_ref[W3_R:W3_R + OUT_PAD, :]                        # (16, 64) bf16 (rows >= OUT are 0)
    b1 = b_ref[W1_R:W1_R + HID, :]                            # (64, 1)  f32
    b2 = b_ref[W2_R:W2_R + HID, :]                            # (64, 1)  f32
    b3 = b_ref[W3_R:W3_R + OUT_PAD, :]                        # (16, 1)  f32 (rows >= OUT are 0)

    # fc1 + relu   (feature-major: h = W @ x, batch on the lane axis)
    h1 = jnp.dot(w1, xb, preferred_element_type=jnp.float32)  # (64, tb)
    h1 = jnp.maximum(h1 + b1, 0.0).astype(jnp.bfloat16)
    # fc2 + relu
    h2 = jnp.dot(w2, h1, preferred_element_type=jnp.float32)  # (64, tb)
    h2 = jnp.maximum(h2 + b2, 0.0).astype(jnp.bfloat16)
    # fc3 (rows >= OUT of w3/b3 are zero padding -> those logit rows are 0)
    logits = jnp.dot(w3, h2, preferred_element_type=jnp.float32) + b3   # (16, tb)

    # Stash raw logits into this block's lane range of the resident output.
    col = pl.multiple_of(j * tb, tb)
    o_ref[:, pl.ds(col, tb)] = logits

    # Last block: softmax over dim=0 of the original (B, OUT) tensor, i.e.
    # over the batch axis, which is the LANE axis here.  Mask padded lanes.
    @pl.when(j == pl.num_programs(0) - 1)
    def _():
        lg = o_ref[...]                                       # (OUT_PAD, B_pad) f32
        lane = lax.broadcasted_iota(jnp.int32, lg.shape, 1)
        valid = lane < batch
        lgm = jnp.where(valid, lg, jnp.float32(-1e30))
        m = jnp.max(lgm, axis=1, keepdims=True)               # (OUT_PAD, 1)
        e = jnp.where(valid, jnp.exp(lgm - m), 0.0)
        s = jnp.sum(e, axis=1, keepdims=True)                 # (OUT_PAD, 1)
        p = e / s                                             # exact divide (review: drop approx recip)
        row = lax.broadcasted_iota(jnp.int32, p.shape, 0)
        o_ref[...] = jnp.where(row < OUT, p, 0.0)


def pack_params(params):
    """One-time pack of PyTorch-layout (w1,b1,w2,b2,w3,b3) into:
       * a bf16 weight slab (144, 64), segments aligned to 16-row boundaries,
       * an f32 bias slab   (144, 1), rows aligned with the weight segments."""
    w1, b1, w2, b2, w3, b3 = params          # w: (out, in), b: (out,)
    w_slab = jnp.zeros((SLAB_ROWS, SLAB_COLS), jnp.float32)
    w_slab = w_slab.at[W2_R:W2_R + HID, :HID].set(w2)
    w_slab = w_slab.at[W3_R:W3_R + OUT, :HID].set(w3)
    w_slab = w_slab.at[W1_R:W1_R + HID, :IN].set(w1)
    w_slab = w_slab.astype(jnp.bfloat16)

    b_slab = jnp.zeros((SLAB_ROWS, 1), jnp.float32)
    b_slab = b_slab.at[W2_R:W2_R + HID, 0].set(b2)
    b_slab = b_slab.at[W3_R:W3_R + OUT, 0].set(b3)
    b_slab = b_slab.at[W1_R:W1_R + HID, 0].set(b1)
    return w_slab, b_slab


def policy_forward(x, w_slab, b_slab, *, tb=128):
    """x: (B, 4) f32  ->  (B, 2) f32 probabilities (softmax over dim=0)."""
    B = x.shape[0]
    nb = pl.cdiv(B, tb)
    b_pad = nb * tb

    # Feature-major, zero-padded: features 4 -> 8, batch B -> B_pad.
    x_fm = jnp.zeros((IN_PAD, b_pad), jnp.float32).at[:IN, :B].set(x.T)

    kernel = functools.partial(policy_kernel, batch=B, tb=tb)
    out_fm = pl.pallas_call(
        kernel,
        out_shape=jax.ShapeDtypeStruct((OUT_PAD, b_pad), jnp.float32),
        grid_spec=pltpu.PrefetchScalarGridSpec(
            num_scalar_prefetch=0,
            grid=(nb,),
            in_specs=[
                # Streamed per-block activations (only per-step DMA).
                pl.BlockSpec((IN_PAD, tb), lambda j: (0, j)),
                # Parameter slabs: constant index_map -> fetched once, resident.
                pl.BlockSpec((SLAB_ROWS, SLAB_COLS), lambda j: (0, 0)),
                pl.BlockSpec((SLAB_ROWS, 1), lambda j: (0, 0)),
            ],
            # Constant index_map: output block is a resident accumulator for
            # the whole batch of logits until the final softmax/normalize.
            out_specs=pl.BlockSpec((OUT_PAD, b_pad), lambda j: (0, 0)),
        ),
        compiler_params=pltpu.CompilerParams(
            # dim=0 softmax couples all batch blocks -> reduction axis.
            dimension_semantics=("arbitrary",)),
    )(x_fm, w_slab, b_slab)

    return out_fm[:OUT, :B].T                                  # (B, OUT)


def init_params(key):
    """Deterministic init mimicking nn.Linear default (U[-1/sqrt(fan_in), +]),
    stored in PyTorch layout: weight (out_features, in_features), bias (out,)."""
    def linear(key, fan_in, fan_out):
        kw, kb = jax.random.split(key)
        bound = float(fan_in) ** -0.5
        w = jax.random.uniform(kw, (fan_out, fan_in), jnp.float32, -bound, bound)
        b = jax.random.uniform(kb, (fan_out,), jnp.float32, -bound, bound)
        return w, b

    k1, k2, k3 = jax.random.split(key, 3)
    w1, b1 = linear(k1, IN, HID)
    w2, b2 = linear(k2, HID, HID)
    w3, b3 = linear(k3, HID, OUT)
    return (w1, b1, w2, b2, w3, b3)


def policy_forward_ref(x, params):
    """Pure-JAX f32 reference of the PyTorch forward (softmax over dim=0)."""
    w1, b1, w2, b2, w3, b3 = params
    h1 = jnp.maximum(x @ w1.T + b1, 0.0)
    h2 = jnp.maximum(h1 @ w2.T + b2, 0.0)
    logits = h2 @ w3.T + b3
    return jax.nn.softmax(logits, axis=0)


if __name__ == "__main__":
    key = jax.random.PRNGKey(0)
    kx, kp = jax.random.split(key)

    B = 200  # small batch of CartPole-like states; pads to 256 -> 2 grid steps
    x = jax.random.normal(kx, (B, IN), jnp.float32)
    params = init_params(kp)
    w_slab, b_slab = pack_params(params)   # one-time bf16/f32 slab pack

    out = policy_forward(x, w_slab, b_slab, tb=128)
    out = jax.block_until_ready(out)

    ref = policy_forward_ref(x, params)
    assert out.shape == (B, OUT), out.shape
    err = float(jnp.max(jnp.abs(out - ref)))
    # Only remaining error source is the bf16 weight/activation MXU operands
    # (f32 accumulation, f32 biases, exact f32 softmax).
    assert jnp.allclose(out, ref, atol=1e-3, rtol=3e-2), f"mismatch vs ref (max abs err={err:.3e})"
    # Columns of a dim=0 softmax each sum to 1.
    assert jnp.allclose(jnp.sum(out, axis=0), jnp.ones((OUT,), jnp.float32), atol=1e-4)

    print("KERNEL_OK")
</pallas_src>

<mosaic_0001>
module attributes {stable_mosaic.version = 11 : i64} {
  func.func @policy_kernel(%arg0: i32, %arg1: memref<8x128xf32, #tpu.memory_space<vmem>>, %arg2: memref<144x64xbf16, #tpu.memory_space<vmem>>, %arg3: memref<144x1xf32, #tpu.memory_space<vmem>>, %arg4: memref<16x256xf32, #tpu.memory_space<vmem>>) attributes {dimension_semantics = [#tpu.dimension_semantics<arbitrary>], iteration_bounds = array<i64: 2>, scalar_prefetch = 0 : i64, scratch_operands = 0 : i64, tpu.core_type = #tpu.core_type<tc>, window_params = [{transform_indices = @transform_0, window_bounds = array<i64: 8, 128>}, {pipeline_mode = #tpu.pipeline_mode<synchronous>, transform_indices = @transform_1, window_bounds = array<i64: 144, 64>}, {pipeline_mode = #tpu.pipeline_mode<synchronous>, transform_indices = @transform_2, window_bounds = array<i64: 144, 1>}, {pipeline_mode = #tpu.pipeline_mode<synchronous>, transform_indices = @transform_3, window_bounds = array<i64: 16, 256>}]} {
    %c0 = arith.constant 0 : index
    %c0_0 = arith.constant 0 : index
    %0 = vector.load %arg1[%c0, %c0_0] : memref<8x128xf32, #tpu.memory_space<vmem>>, vector<8x128xf32>
    %1 = arith.truncf %0 : vector<8x128xf32> to vector<8x128xbf16>
    %c80 = arith.constant 80 : index
    %c0_1 = arith.constant 0 : index
    %2 = vector.load %arg2[%c80, %c0_1] : memref<144x64xbf16, #tpu.memory_space<vmem>>, vector<64x8xbf16>
    %c0_2 = arith.constant 0 : index
    %c0_3 = arith.constant 0 : index
    %3 = vector.load %arg2[%c0_2, %c0_3] : memref<144x64xbf16, #tpu.memory_space<vmem>>, vector<64x64xbf16>
    %c64 = arith.constant 64 : index
    %c0_4 = arith.constant 0 : index
    %4 = vector.load %arg2[%c64, %c0_4] : memref<144x64xbf16, #tpu.memory_space<vmem>>, vector<16x64xbf16>
    %c80_5 = arith.constant 80 : index
    %c0_6 = arith.constant 0 : index
    %5 = vector.load %arg3[%c80_5, %c0_6] : memref<144x1xf32, #tpu.memory_space<vmem>>, vector<64x1xf32>
    %c0_7 = arith.constant 0 : index
    %c0_8 = arith.constant 0 : index
    %6 = vector.load %arg3[%c0_7, %c0_8] : memref<144x1xf32, #tpu.memory_space<vmem>>, vector<64x1xf32>
    %c64_9 = arith.constant 64 : index
    %c0_10 = arith.constant 0 : index
    %7 = vector.load %arg3[%c64_9, %c0_10] : memref<144x1xf32, #tpu.memory_space<vmem>>, vector<16x1xf32>
    %cst = arith.constant dense<0.000000e+00> : vector<64x128xf32>
    %8 = tpu.matmul %2, %1, %cst {dimension_numbers = #tpu.dot_dimension_numbers<[1], [0], [0], [1], [0, 0, 1, 1], [], []>} : vector<64x8xbf16>, vector<8x128xbf16>, vector<64x128xf32> -> vector<64x128xf32>
    %9 = vector.broadcast %5 : vector<64x1xf32> to vector<64x128xf32>
    %10 = arith.addf %8, %9 : vector<64x128xf32>
    %cst_11 = arith.constant 0.000000e+00 : f32
    %11 = vector.broadcast %cst_11 : f32 to vector<64x128xf32>
    %12 = arith.maximumf %10, %11 : vector<64x128xf32>
    %13 = arith.truncf %12 : vector<64x128xf32> to vector<64x128xbf16>
    %cst_12 = arith.constant dense<0.000000e+00> : vector<64x128xf32>
    %14 = tpu.matmul %3, %13, %cst_12 {dimension_numbers = #tpu.dot_dimension_numbers<[1], [0], [0], [1], [0, 0, 1, 1], [], []>} : vector<64x64xbf16>, vector<64x128xbf16>, vector<64x128xf32> -> vector<64x128xf32>
    %15 = vector.broadcast %6 : vector<64x1xf32> to vector<64x128xf32>
    %16 = arith.addf %14, %15 : vector<64x128xf32>
    %cst_13 = arith.constant 0.000000e+00 : f32
    %17 = vector.broadcast %cst_13 : f32 to vector<64x128xf32>
    %18 = arith.maximumf %16, %17 : vector<64x128xf32>
    %19 = arith.truncf %18 : vector<64x128xf32> to vector<64x128xbf16>
    %cst_14 = arith.constant dense<0.000000e+00> : vector<16x128xf32>
    %20 = tpu.matmul %4, %19, %cst_14 {dimension_numbers = #tpu.dot_dimension_numbers<[1], [0], [0], [1], [0, 0, 1, 1], [], []>} : vector<16x64xbf16>, vector<64x128xbf16>, vector<16x128xf32> -> vector<16x128xf32>
    %21 = vector.broadcast %7 : vector<16x1xf32> to vector<16x128xf32>
    %22 = arith.addf %20, %21 : vector<16x128xf32>
    %c128_i32 = arith.constant 128 : i32
    %23 = arith.muli %arg0, %c128_i32 : i32
    %24 = tpu.assume_multiple %23, 128 : i32
    %c0_15 = arith.constant 0 : index
    %25 = arith.index_cast %24 : i32 to index
    %26 = vector.load %arg4[%c0_15, %25] : memref<16x256xf32, #tpu.memory_space<vmem>>, vector<16x128xf32>
    tpu.vector_store %arg4[%c0_15, %25], %22 {strides = array<i32>} : memref<16x256xf32, #tpu.memory_space<vmem>>, vector<16x128xf32>,
    %c1_i32 = arith.constant 1 : i32
    %27 = arith.cmpi eq, %arg0, %c1_i32 : i32
    %28 = arith.extui %27 : i1 to i32
    %c0_i32 = arith.constant 0 : i32
    %29 = arith.cmpi ne, %28, %c0_i32 : i32
    scf.if %29 {
      %c0_16 = arith.constant 0 : index
      %c0_17 = arith.constant 0 : index
      %30 = vector.load %arg4[%c0_16, %c0_17] : memref<16x256xf32, #tpu.memory_space<vmem>>, vector<16x256xf32>
      %31 = tpu.iota {dimensions = array<i32: 1>} : vector<16x256xi32>
      %c200_i32 = arith.constant 200 : i32
      %32 = vector.broadcast %c200_i32 : i32 to vector<16x256xi32>
      %33 = arith.cmpi slt, %31, %32 : vector<16x256xi32>
      %cst_18 = arith.constant -1.000000e+30 : f32
      %34 = vector.broadcast %cst_18 : f32 to vector<16x256xf32>
      %35 = arith.select %33, %30, %34 : vector<16x256xi1>, vector<16x256xf32>
      %cst_19 = arith.constant dense<0xFF800000> : vector<16xf32>
      %36 = vector.multi_reduction <maximumf>, %35, %cst_19 [1] : vector<16x256xf32> to vector<16xf32>
      %37 = vector.shape_cast %36 : vector<16xf32> to vector<16x1xf32>
      %38 = vector.broadcast %37 : vector<16x1xf32> to vector<16x256xf32>
      %39 = arith.subf %35, %38 : vector<16x256xf32>
      %40 = math.exp %39 : vector<16x256xf32>
      %cst_20 = arith.constant 0.000000e+00 : f32
      %41 = vector.broadcast %cst_20 : f32 to vector<16x256xf32>
      %42 = arith.select %33, %40, %41 : vector<16x256xi1>, vector<16x256xf32>
      %cst_21 = arith.constant dense<0.000000e+00> : vector<16xf32>
      %43 = vector.multi_reduction <add>, %42, %cst_21 [1] : vector<16x256xf32> to vector<16xf32>
      %44 = vector.shape_cast %43 : vector<16xf32> to vector<16x1xf32>
      %45 = vector.broadcast %44 : vector<16x1xf32> to vector<16x256xf32>
      %46 = arith.divf %42, %45 : vector<16x256xf32>
      %47 = tpu.iota {dimensions = array<i32: 0>} : vector<16x256xi32>
      %c2_i32 = arith.constant 2 : i32
      %48 = vector.broadcast %c2_i32 : i32 to vector<16x256xi32>
      %49 = arith.cmpi slt, %47, %48 : vector<16x256xi32>
      %cst_22 = arith.constant 0.000000e+00 : f32
      %50 = vector.broadcast %cst_22 : f32 to vector<16x256xf32>
      %51 = arith.select %49, %46, %50 : vector<16x256xi1>, vector<16x256xf32>
      %c0_23 = arith.constant 0 : index
      %c0_24 = arith.constant 0 : index
      %52 = vector.load %arg4[%c0_23, %c0_24] : memref<16x256xf32, #tpu.memory_space<vmem>>, vector<16x256xf32>
      tpu.vector_store %arg4[%c0_23, %c0_24], %51 {strides = array<i32>} : memref<16x256xf32, #tpu.memory_space<vmem>>, vector<16x256xf32>,
    } else {
    }
    return
  }
  func.func @transform_0(%arg0: i32) -> (i32, i32) {
    %c0_i32 = arith.constant 0 : i32
    %c0_i32_0 = arith.constant 0 : i32
    return %c0_i32, %arg0 : i32, i32
  }
  func.func @transform_1(%arg0: i32) -> (i32, i32) {
    %c0_i32 = arith.constant 0 : i32
    %c0_i32_0 = arith.constant 0 : i32
    %c0_i32_1 = arith.constant 0 : i32
    return %c0_i32, %c0_i32_0 : i32, i32
  }
  func.func @transform_2(%arg0: i32) -> (i32, i32) {
    %c0_i32 = arith.constant 0 : i32
    %c0_i32_0 = arith.constant 0 : i32
    %c0_i32_1 = arith.constant 0 : i32
    return %c0_i32, %c0_i32_0 : i32, i32
  }
  func.func @transform_3(%arg0: i32) -> (i32, i32) {
    %c0_i32 = arith.constant 0 : i32
    %c0_i32_0 = arith.constant 0 : i32
    %c0_i32_1 = arith.constant 0 : i32
    return %c0_i32, %c0_i32_0 : i32, i32
  }
}

</mosaic_0001>

<llo_original>
// kernel: tpu_custom_call.1
$region0: #{tpu_custom_call.1}
  #allocation0 [shape = 'u32[]', space=smem, size = 0x4, offset = 0x4, fixed_abs, tag = 'smem constant byte address 0x4 - core index']
  #allocation1 [shape = 'u32[144,128]{1,0:T(1,128)}', space=vmem, size = 0x12000, scoped, tag = 'internal scratch']
  %s0 = inlined_call_operand.vmem [shape: f32[8,256], index: 0, kind: input, shape index: {}]
  %s1 = inlined_call_operand.vmem [shape: bf16[144,64], index: 1, kind: input, shape index: {}]
  %s2 = inlined_call_operand.vmem [shape: f32[144,1], index: 2, kind: input, shape index: {}]
  %s3 = inlined_call_operand.hbm [shape: f32[16,256], index: 3, kind: output, shape index: {}]
  %s4 = sld [smem:[#allocation0]]
  $region49: #{tpu_custom_call.1} parent=0
    _
  %s6 = ssub.s32 1, %s4
  %s7 = scalar_select 0, %s6, %s4
  $region1: #{tpu_custom_call.1} parent=0
    #allocation2 [shape = 'u8[16384]{0}', space=vmem, size = 0x4000, scoped, tag = 'output window, operand 0, single buffered']
    #allocation3 [shape = 's32[2]{0}', space=sflag, size = 0x8, scoped, tag = 'scoped memory for tpu_custom_call.1']
    %8 = vsyncpa [#allocation3], 0
    loop: start=0, step=1, limit=4
    $region2: #{tpu_custom_call.1} parent=1 // loop_pre_header
      _
    $region3: #{tpu_custom_call.1} parent=1 // loop_header
      %s10 = sphi 0, %s14
      %p11 = scmp.ge.s32.totalorder %s10, 4
      %s20 = sphi 0, %s22
      %s23 = sphi 0, %s20
      %s24 = sphi 0, %s23
      %s40 = sphi 0, %s24
      %s44 = sphi 0, %s44
      %s46 = sphi 0, %s44
      %s47 = sphi 0, %s46
      %s61 = sphi 0, %s47
      %s65 = sphi 0, %s65
      %s67 = sphi 0, %s65
      %s68 = sphi 0, %s67
      %s82 = sphi 0, %s68
      %s86 = sphi 0, %s86
      %s88 = sphi 0, %s86
      %s89 = sphi 0, %s88
      %s103 = sphi 0, %s89
    $region4: #{tpu_custom_call.1} parent=1 // loop_header_branch
      %13 = sbr.rel (%p11) target = $region8
    $region5: #{tpu_custom_call.1} parent=1 // loop_body
      %s15 = ssub.s32 %s10, 1
      %s16 = ssub.s32 %s10, 2
      %s17 = sadd.s32 %s10, 1
      %s18 = ssub.s32 %s10, %s17
      %p19 = scmp.eq.s32.totalorder %s18, 0
      %s21 = sadd.s32 %s20, 1
      %s22 = scalar_select %p19, %s20, %s21
      %p25 = pneg %p19
      %p26 = scmp.eq.s32.totalorder %s10, 1
      %p27 = por %p25, %p26
      %p28 = scmp.ne.s32.totalorder %s20, %s23
      %p29 = scmp.eq.s32.totalorder %s10, 0
      %p30 = por %p28, %p29
      %p31 = scmp.ne.s32.totalorder %s20, %s23
      %p32 = scmp.eq.s32.totalorder %s15, 1
      %p33 = por %p31, %p32
      %p34 = scmp.ne.s32.totalorder %s23, %s24
      %p35 = scmp.eq.s32.totalorder %s15, 0
      %p36 = por %p34, %p35
      %p37 = scmp.ne.s32.totalorder %s23, %s24
      %p38 = scmp.eq.s32.totalorder %s16, 1
      %p39 = por %p37, %p38
      %p41 = scmp.ne.s32.totalorder %s24, %s40
      %p42 = scmp.eq.s32.totalorder %s16, 0
      %p43 = por %p41, %p42
      %s45 = sadd.s32 %s44, 1
      %p48 = scmp.eq.s32.totalorder %s10, 1
      %p49 = scmp.ne.s32.totalorder %s44, %s46
      %p50 = scmp.eq.s32.totalorder %s10, 0
      %p51 = por %p49, %p50
      %p52 = scmp.ne.s32.totalorder %s44, %s46
      %p53 = scmp.eq.s32.totalorder %s15, 1
      %p54 = por %p52, %p53
      %p55 = scmp.ne.s32.totalorder %s46, %s47
      %p56 = scmp.eq.s32.totalorder %s15, 0
      %p57 = por %p55, %p56
      %p58 = scmp.ne.s32.totalorder %s46, %s47
      %p59 = scmp.eq.s32.totalorder %s16, 1
      %p60 = por %p58, %p59
      %p62 = scmp.ne.s32.totalorder %s47, %s61
      %p63 = scmp.eq.s32.totalorder %s16, 0
      %p64 = por %p62, %p63
      %s66 = sadd.s32 %s65, 1
      %p69 = scmp.eq.s32.totalorder %s10, 1
      %p70 = scmp.ne.s32.totalorder %s65, %s67
      %p71 = scmp.eq.s32.totalorder %s10, 0
      %p72 = por %p70, %p71
      %p73 = scmp.ne.s32.totalorder %s65, %s67
      %p74 = scmp.eq.s32.totalorder %s15, 1
      %p75 = por %p73, %p74
      %p76 = scmp.ne.s32.totalorder %s67, %s68
      %p77 = scmp.eq.s32.totalorder %s15, 0
      %p78 = por %p76, %p77
      %p79 = scmp.ne.s32.totalorder %s67, %s68
      %p80 = scmp.eq.s32.totalorder %s16, 1
      %p81 = por %p79, %p80
      %p83 = scmp.ne.s32.totalorder %s68, %s82
      %p84 = scmp.eq.s32.totalorder %s16, 0
      %p85 = por %p83, %p84
      %s87 = sadd.s32 %s86, 1
      %p90 = scmp.eq.s32.totalorder %s10, 1
      %p91 = scmp.ne.s32.totalorder %s86, %s88
      %p92 = scmp.eq.s32.totalorder %s10, 0
      %p93 = por %p91, %p92
      %p94 = scmp.ne.s32.totalorder %s86, %s88
      %p95 = scmp.eq.s32.totalorder %s15, 1
      %p96 = por %p94, %p95
      %p97 = scmp.ne.s32.totalorder %s88, %s89
      %p98 = scmp.eq.s32.totalorder %s15, 0
      %p99 = por %p97, %p98
      %p100 = scmp.ne.s32.totalorder %s88, %s89
      %p101 = scmp.eq.s32.totalorder %s16, 1
      %p102 = por %p100, %p101
      %p104 = scmp.ne.s32.totalorder %s89, %s103
      %p105 = scmp.eq.s32.totalorder %s16, 0
      %p106 = por %p104, %p105
      %p107 = scmp.le.s32.totalorder 1, %s10
      %p108 = scmp.lt.s32.totalorder %s10, 3
      %p109 = pnand %p107, %p108
      %p110 = pneg %p109
      // Predicated region
      $region9: #{tpu_custom_call.1} parent=5 // pred_check
        _
      $region10: #{tpu_custom_call.1} parent=5 // pred_check_branch
        %112 = sbr.rel (%p109) target = $region12
      $region11: #{tpu_custom_call.1} parent=5 // pred_region
        %s113 = ssub.s32 %s10, 1
        // Predicated region
        $region13: #{tpu_custom_call.1} parent=11 // pred_check
          %p114 = pneg %p57
        $region14: #{tpu_custom_call.1} parent=11 // pred_check_branch
          %116 = sbr.rel (%p114) target = $region16
        $region15: #{tpu_custom_call.1} parent=11 // pred_region
          _
        $region16: #{tpu_custom_call.1} parent=11 // pred_fallthru
          _
        // Predicated region
        $region17: #{tpu_custom_call.1} parent=11 // pred_check
          %p117 = pneg %p78
        $region18: #{tpu_custom_call.1} parent=11 // pred_check_branch
          %119 = sbr.rel (%p117) target = $region20
        $region19: #{tpu_custom_call.1} parent=11 // pred_region
          _
        $region20: #{tpu_custom_call.1} parent=11 // pred_fallthru
          _
      $region12: #{tpu_custom_call.1} parent=5 // pred_fallthru
        _
      %p120 = scmp.lt.s32.totalorder %s10, 2
      // Predicated region
      $region21: #{tpu_custom_call.1} parent=5 // pred_check
        %p121 = pneg %p120
      $region22: #{tpu_custom_call.1} parent=5 // pred_check_branch
        %123 = sbr.rel (%p121) target = $region24
      $region23: #{tpu_custom_call.1} parent=5 // pred_region
        // Predicated region
        $region25: #{tpu_custom_call.1} parent=23 // pred_check
          %p124 = pneg %p30
        $region26: #{tpu_custom_call.1} parent=23 // pred_check_branch
          %126 = sbr.rel (%p124) target = $region28
        $region27: #{tpu_custom_call.1} parent=23 // pred_region
          %p127 = scmp.lt.s32.totalorder %s10, 1
          %s128 = scalar_select %p127, %s10, 1
          %s129 = smul.addr %s128, 8
          %s130 = scalar_lea.vmem %s0, %s129
        $region28: #{tpu_custom_call.1} parent=23 // pred_fallthru
          _
      $region24: #{tpu_custom_call.1} parent=5 // pred_fallthru
        _
      %p131 = scmp.le.s32.totalorder 1, %s10
      %p132 = scmp.lt.s32.totalorder %s10, 3
      %p133 = pnand %p131, %p132
      %p134 = pneg %p133
      // Predicated region
      $region29: #{tpu_custom_call.1} parent=5 // pred_check
        _
      $region30: #{tpu_custom_call.1} parent=5 // pred_check_branch
        %136 = sbr.rel (%p133) target = $region32
      $region31: #{tpu_custom_call.1} parent=5 // pred_region
        %s137 = ssub.s32 %s10, 1
        %p138 = scmp.lt.s32.totalorder %s15, 1
        %s139 = scalar_select %p138, %s15, 1
        %s140 = smul.addr %s139, 8
        %s141 = scalar_lea.vmem %s0, %s140
        %p142 = pneg %p36
        %p143 = pneg %p33
        %p144 = pneg %p57
        %p145 = pneg %p54
        %p146 = pneg %p78
        %p147 = pneg %p75
        %p148 = pneg %p99
        %p149 = pneg %p96
        %p150 = scmp.lt.s32.totalorder %s15, 1
        %s151 = scalar_select %p150, %s15, 1
        %s152 = smul.addr %s151, 8
        %s153 = scalar_lea.vmem %s0, %s152
        %v155 = vld [vmem:[%s153] sm:$0xff]
        %v156 = vpack.c.bf16 %v155, %v155
        %v157 = vld [vmem:[%s1 + $0x28] sm:$0xf]
        %v158 = vld [vmem:[%s1 + $0x2c] sm:$0xf]
        %v159 = vld [vmem:[%s1 + $0x30] sm:$0xf]
        %v160 = vld [vmem:[%s1 + $0x34] sm:$0xf]
        %v161 = vld [vmem:[%s1 + $0x38] sm:$0xf]
        %v162 = vld [vmem:[%s1 + $0x3c] sm:$0xf]
        %v163 = vld [vmem:[%s1 + $0x40] sm:$0xf]
        %v164 = vld [vmem:[%s1 + $0x44] sm:$0xf]
        %v165 = vld [vmem:[%s1] sm:$0xf]
        %v166 = vld [vmem:[%s1 + $0x4] sm:$0xf]
        %v167 = vld [vmem:[%s1 + $0x8] sm:$0xf]
        %v168 = vld [vmem:[%s1 + $0xc] sm:$0xf]
        %v169 = vld [vmem:[%s1 + $0x10] sm:$0xf]
        %v170 = vld [vmem:[%s1 + $0x14] sm:$0xf]
        %v171 = vld [vmem:[%s1 + $0x18] sm:$0xf]
        %v172 = vld [vmem:[%s1 + $0x1c] sm:$0xf]
        %v173 = vld [vmem:[%s1 + $0x20] sm:$0xf]
        %v174 = vld [vmem:[%s1 + $0x24] sm:$0xf]
        %v175 = vld [vmem:[%s2 + $0x50] sm:$0xff]
        %v176 = vld [vmem:[%s2 + $0x58] sm:$0xff]
        %v177 = vld [vmem:[%s2 + $0x60] sm:$0xff]
        %v178 = vld [vmem:[%s2 + $0x68] sm:$0xff]
        %v179 = vld [vmem:[%s2 + $0x70] sm:$0xff]
        %v180 = vld [vmem:[%s2 + $0x78] sm:$0xff]
        %v181 = vld [vmem:[%s2 + $0x80] sm:$0xff]
        %v182 = vld [vmem:[%s2 + $0x88] sm:$0xff]
        %v183 = vld [vmem:[%s2] sm:$0xff]
        %v184 = vld [vmem:[%s2 + $0x8] sm:$0xff]
        %v185 = vld [vmem:[%s2 + $0x10] sm:$0xff]
        %v186 = vld [vmem:[%s2 + $0x18] sm:$0xff]
        %v187 = vld [vmem:[%s2 + $0x20] sm:$0xff]
        %v188 = vld [vmem:[%s2 + $0x28] sm:$0xff]
        %v189 = vld [vmem:[%s2 + $0x30] sm:$0xff]
        %v190 = vld [vmem:[%s2 + $0x38] sm:$0xff]
        %v191 = vld [vmem:[%s2 + $0x40] sm:$0xff]
        %v192 = vld [vmem:[%s2 + $0x48] sm:$0xff]
        %194 = vset.pattern.permute.xlu0 0
        %195 = vperm.xlu0 %194, %v175
        %v196 = vpop.permute.xlu0 %195
        %199 = vset.pattern.permute.xlu0 0
        %200 = vperm.xlu0 %199, %v176
        %v201 = vpop.permute.xlu0 %200
        %204 = vset.pattern.permute.xlu0 0
        %205 = vperm.xlu0 %204, %v177
        %v206 = vpop.permute.xlu0 %205
        %209 = vset.pattern.permute.xlu0 0
        %210 = vperm.xlu0 %209, %v178
        %v211 = vpop.permute.xlu0 %210
        %214 = vset.pattern.permute.xlu0 0
        %215 = vperm.xlu0 %214, %v179
        %v216 = vpop.permute.xlu0 %215
        %219 = vset.pattern.permute.xlu0 0
        %220 = vperm.xlu0 %219, %v180
        %v221 = vpop.permute.xlu0 %220
        %224 = vset.pattern.permute.xlu0 0
        %225 = vperm.xlu0 %224, %v181
        %v226 = vpop.permute.xlu0 %225
        %229 = vset.pattern.permute.xlu0 0
        %230 = vperm.xlu0 %229, %v182
        %v231 = vpop.permute.xlu0 %230
        %v241 = vunpack.c.l.b16 %v157
        %v242 = vunpack.c.l.b16 %v158
        %v243 = vunpack.c.l.b16 %v159
        %v244 = vunpack.c.l.b16 %v160
        %v245 = vunpack.c.l.b16 %v161
        %v246 = vunpack.c.l.b16 %v162
        %v247 = vunpack.c.l.b16 %v163
        %v248 = vunpack.c.l.b16 %v164
        %v249 = vpack.c.b16 %v242, %v241
        %v250 = vpack.c.b16 %v244, %v243
        %v251 = vpack.c.b16 %v246, %v245
        %v252 = vpack.c.b16 %v248, %v247
        %vm253 = vcmask 64512
        %v255 = vsel %vm253, %v249, 0
        %v258 = vsel %vm253, %v250, 0
        %v261 = vsel %vm253, %v251, 0
        %v264 = vsel %vm253, %v252, 0
        %vm266 = vcmask 1043456
        %v268 = vsel %vm266, %v156, 0
        %270 = vmatprep.subr.bf16.mxu0 0
        %271 = vmatpush1.bf16.msra.mxu0 %v268
        %272 = vmatprep.subr.bf16.mxu0 0
        %273 = vmatpush1.bf16.msra.mxu0 0
        %274 = vmatprep.subr.bf16.mxu0 0
        %275 = vmatpush1.bf16.msra.mxu0 0
        %276 = vmatprep.subr.bf16.mxu0 0
        %277 = vmatpush1.bf16.msra.mxu0 0
        %278 = vmatprep.subr.bf16.mxu0 0
        %279 = vmatpush1.bf16.msra.mxu0 0
        %280 = vmatprep.subr.bf16.mxu0 0
        %281 = vmatpush1.bf16.msra.mxu0 0
        %282 = vmatprep.subr.bf16.mxu0 0
        %283 = vmatpush1.bf16.msra.mxu0 0
        %284 = vmatprep.subr.bf16.mxu0 0
        %285 = vmatpush1.bf16.msra.mxu0 0
        %286 = vmatprep.subr.bf16.mxu0 0
        %287 = vmatpush1.bf16.msra.mxu0 0
        %288 = vmatprep.subr.bf16.mxu0 0
        %289 = vmatpush1.bf16.msra.mxu0 0
        %290 = vmatprep.subr.bf16.mxu0 0
        %291 = vmatpush1.bf16.msra.mxu0 0
        %292 = vmatprep.subr.bf16.mxu0 0
        %293 = vmatpush1.bf16.msra.mxu0 0
        %294 = vmatprep.subr.bf16.mxu0 0
        %295 = vmatpush1.bf16.msra.mxu0 0
        %296 = vmatprep.subr.bf16.mxu0 0
        %297 = vmatpush1.bf16.msra.mxu0 0
        %298 = vmatprep.subr.bf16.mxu0 0
        %299 = vmatpush1.bf16.msra.mxu0 0
        %300 = vmatprep.subr.bf16.mxu0 0
        %301 = vmatpush1.bf16.msra.mxu0 0
        %302 = vmatprep.mubr.bf16.mxu0 0
        %303 = vmatmul.mubr.bf16.gmra.mrb[0].mxu0 %v255
        %v304 = vpop.f32.mrb[0].mxu0
        %v305 = vadd.f32 %v196, %v304
        %v306 = vpop.f32.mrb[0].mxu0
        %v307 = vpop.f32.mrb[0].mxu0
        %v308 = vadd.f32 %v201, %v307
        %v309 = vpop.f32.mrb[0].mxu0
        %310 = vmatprep.mubr.bf16.mxu0 0
        %311 = vmatmul.mubr.bf16.gmra.mrb[0].mxu0 %v258
        %v312 = vpop.f32.mrb[0].mxu0
        %v313 = vadd.f32 %v206, %v312
        %v314 = vpop.f32.mrb[0].mxu0
        %v315 = vpop.f32.mrb[0].mxu0
        %v316 = vadd.f32 %v211, %v315
        %v317 = vpop.f32.mrb[0].mxu0
        %318 = vmatprep.mubr.bf16.mxu0 0
        %319 = vmatmul.mubr.bf16.gmra.mrb[0].mxu0 %v261
        %v320 = vpop.f32.mrb[0].mxu0
        %v321 = vadd.f32 %v216, %v320
        %v322 = vpop.f32.mrb[0].mxu0
        %v323 = vpop.f32.mrb[0].mxu0
        %v324 = vadd.f32 %v221, %v323
        %v325 = vpop.f32.mrb[0].mxu0
        %326 = vmatprep.mubr.bf16.mxu0 0
        %327 = vmatmul.mubr.bf16.gmra.mrb[0].mxu0 %v264
        %v328 = vpop.f32.mrb[0].mxu0
        %v329 = vadd.f32 %v226, %v328
        %v330 = vpop.f32.mrb[0].mxu0
        %v331 = vpop.f32.mrb[0].mxu0
        %v332 = vadd.f32 %v231, %v331
        %v333 = vpop.f32.mrb[0].mxu0
        %334 = vdwg.mxu0
        %v335 = vmax.f32 %v305, 0.0
        %v336 = vmax.f32 %v308, 0.0
        %v337 = vmax.f32 %v313, 0.0
        %v338 = vmax.f32 %v316, 0.0
        %v339 = vmax.f32 %v321, 0.0
        %v340 = vmax.f32 %v324, 0.0
        %v341 = vmax.f32 %v329, 0.0
        %v342 = vmax.f32 %v332, 0.0
        %v343 = vpack.c.bf16 %v336, %v335
        %v344 = vpack.c.bf16 %v338, %v337
        %v345 = vpack.c.bf16 %v340, %v339
        %v346 = vpack.c.bf16 %v342, %v341
        %348 = vset.pattern.permute.xlu0 0
        %349 = vperm.xlu0 %348, %v183
        %v350 = vpop.permute.xlu0 %349
        %353 = vset.pattern.permute.xlu0 0
        %354 = vperm.xlu0 %353, %v184
        %v355 = vpop.permute.xlu0 %354
        %358 = vset.pattern.permute.xlu0 0
        %359 = vperm.xlu0 %358, %v185
        %v360 = vpop.permute.xlu0 %359
        %363 = vset.pattern.permute.xlu0 0
        %364 = vperm.xlu0 %363, %v186
        %v365 = vpop.permute.xlu0 %364
        %368 = vset.pattern.permute.xlu0 0
        %369 = vperm.xlu0 %368, %v187
        %v370 = vpop.permute.xlu0 %369
        %373 = vset.pattern.permute.xlu0 0
        %374 = vperm.xlu0 %373, %v188
        %v375 = vpop.permute.xlu0 %374
        %378 = vset.pattern.permute.xlu0 0
        %379 = vperm.xlu0 %378, %v189
        %v380 = vpop.permute.xlu0 %379
        %383 = vset.pattern.permute.xlu0 0
        %384 = vperm.xlu0 %383, %v190
        %v385 = vpop.permute.xlu0 %384
        %v395 = vunpack.c.l.b16 %v165
        %v396 = vunpack.c.l.b16 %v166
        %v397 = vunpack.c.l.b16 %v167
        %v398 = vunpack.c.l.b16 %v168
        %v399 = vunpack.c.l.b16 %v169
        %v400 = vunpack.c.l.b16 %v170
        %v401 = vunpack.c.l.b16 %v171
        %v402 = vunpack.c.l.b16 %v172
        %v403 = vpack.c.b16 %v396, %v395
        %v404 = vpack.c.b16 %v398, %v397
        %v405 = vpack.c.b16 %v400, %v399
        %v406 = vpack.c.b16 %v402, %v401
        %vm407 = vcmask 523264
        %v409 = vsel %vm407, %v403, 0
        %v412 = vsel %vm407, %v404, 0
        %v415 = vsel %vm407, %v405, 0
        %v418 = vsel %vm407, %v406, 0
        %420 = vmatprep.subr.bf16.mxu0 0
        %421 = vmatpush1.bf16.msra.mxu0 %v343
        %422 = vmatprep.subr.bf16.mxu0 0
        %423 = vmatpush1.bf16.msra.mxu0 %v344
        %424 = vmatprep.subr.bf16.mxu0 0
        %425 = vmatpush1.bf16.msra.mxu0 %v345
        %426 = vmatprep.subr.bf16.mxu0 0
        %427 = vmatpush1.bf16.msra.mxu0 %v346
        %428 = vmatprep.subr.bf16.mxu0 0
        %429 = vmatpush1.bf16.msra.mxu0 0
        %430 = vmatprep.subr.bf16.mxu0 0
        %431 = vmatpush1.bf16.msra.mxu0 0
        %432 = vmatprep.subr.bf16.mxu0 0
        %433 = vmatpush1.bf16.msra.mxu0 0
        %434 = vmatprep.subr.bf16.mxu0 0
        %435 = vmatpush1.bf16.msra.mxu0 0
        %436 = vmatprep.subr.bf16.mxu0 0
        %437 = vmatpush1.bf16.msra.mxu0 0
        %438 = vmatprep.subr.bf16.mxu0 0
        %439 = vmatpush1.bf16.msra.mxu0 0
        %440 = vmatprep.subr.bf16.mxu0 0
        %441 = vmatpush1.bf16.msra.mxu0 0
        %442 = vmatprep.subr.bf16.mxu0 0
        %443 = vmatpush1.bf16.msra.mxu0 0
        %444 = vmatprep.subr.bf16.mxu0 0
        %445 = vmatpush1.bf16.msra.mxu0 0
        %446 = vmatprep.subr.bf16.mxu0 0
        %447 = vmatpush1.bf16.msra.mxu0 0
        %448 = vmatprep.subr.bf16.mxu0 0
        %449 = vmatpush1.bf16.msra.mxu0 0
        %450 = vmatprep.subr.bf16.mxu0 0
        %451 = vmatpush1.bf16.msra.mxu0 0
        %452 = vmatprep.mubr.bf16.mxu0 0
        %453 = vmatmul.mubr.bf16.gmra.mrb[0].mxu0 %v409
        %v454 = vpop.f32.mrb[0].mxu0
        %v455 = vadd.f32 %v350, %v454
        %v456 = vpop.f32.mrb[0].mxu0
        %v457 = vpop.f32.mrb[0].mxu0
        %v458 = vadd.f32 %v355, %v457
        %v459 = vpop.f32.mrb[0].mxu0
        %460 = vmatprep.mubr.bf16.mxu0 0
        %461 = vmatmul.mubr.bf16.gmra.mrb[0].mxu0 %v412
        %v462 = vpop.f32.mrb[0].mxu0
        %v463 = vadd.f32 %v360, %v462
        %v464 = vpop.f32.mrb[0].mxu0
        %v465 = vpop.f32.mrb[0].mxu0
        %v466 = vadd.f32 %v365, %v465
        %v467 = vpop.f32.mrb[0].mxu0
        %468 = vmatprep.mubr.bf16.mxu0 0
        %469 = vmatmul.mubr.bf16.gmra.mrb[0].mxu0 %v415
        %v470 = vpop.f32.mrb[0].mxu0
        %v471 = vadd.f32 %v370, %v470
        %v472 = vpop.f32.mrb[0].mxu0
        %v473 = vpop.f32.mrb[0].mxu0
        %v474 = vadd.f32 %v375, %v473
        %v475 = vpop.f32.mrb[0].mxu0
        %476 = vmatprep.mubr.bf16.mxu0 0
        %477 = vmatmul.mubr.bf16.gmra.mrb[0].mxu0 %v418
        %v478 = vpop.f32.mrb[0].mxu0
        %v479 = vadd.f32 %v380, %v478
        %v480 = vpop.f32.mrb[0].mxu0
        %v481 = vpop.f32.mrb[0].mxu0
        %v482 = vadd.f32 %v385, %v481
        %v483 = vpop.f32.mrb[0].mxu0
        %484 = vdwg.mxu0
        %v485 = vmax.f32 %v455, 0.0
        %v486 = vmax.f32 %v458, 0.0
        %v487 = vmax.f32 %v463, 0.0
        %v488 = vmax.f32 %v466, 0.0
        %v489 = vmax.f32 %v471, 0.0
        %v490 = vmax.f32 %v474, 0.0
        %v491 = vmax.f32 %v479, 0.0
        %v492 = vmax.f32 %v482, 0.0
        %v493 = vpack.c.bf16 %v486, %v485
        %v494 = vpack.c.bf16 %v488, %v487
        %v495 = vpack.c.bf16 %v490, %v489
        %v496 = vpack.c.bf16 %v492, %v491
        %498 = vset.pattern.permute.xlu0 0
        %499 = vperm.xlu0 %498, %v191
        %v500 = vpop.permute.xlu0 %499
        %503 = vset.pattern.permute.xlu0 0
        %504 = vperm.xlu0 %503, %v192
        %v505 = vpop.permute.xlu0 %504
        %v509 = vunpack.c.l.b16 %v173
        %v510 = vunpack.c.l.b16 %v174
        %v511 = vpack.c.b16 %v510, %v509
        %v513 = vsel %vm407, %v511, 0
        %515 = vmatprep.subr.bf16.mxu0 0
        %516 = vmatpush1.bf16.msra.mxu0 %v493
        %517 = vmatprep.subr.bf16.mxu0 0
        %518 = vmatpush1.bf16.msra.mxu0 %v494
        %519 = vmatprep.subr.bf16.mxu0 0
        %520 = vmatpush1.bf16.msra.mxu0 %v495
        %521 = vmatprep.subr.bf16.mxu0 0
        %522 = vmatpush1.bf16.msra.mxu0 %v496
        %523 = vmatprep.subr.bf16.mxu0 0
        %524 = vmatpush1.bf16.msra.mxu0 0
        %525 = vmatprep.subr.bf16.mxu0 0
        %526 = vmatpush1.bf16.msra.mxu0 0
        %527 = vmatprep.subr.bf16.mxu0 0
        %528 = vmatpush1.bf16.msra.mxu0 0
        %529 = vmatprep.subr.bf16.mxu0 0
        %530 = vmatpush1.bf16.msra.mxu0 0
        %531 = vmatprep.subr.bf16.mxu0 0
        %532 = vmatpush1.bf16.msra.mxu0 0
        %533 = vmatprep.subr.bf16.mxu0 0
        %534 = vmatpush1.bf16.msra.mxu0 0
        %535 = vmatprep.subr.bf16.mxu0 0
        %536 = vmatpush1.bf16.msra.mxu0 0
        %537 = vmatprep.subr.bf16.mxu0 0
        %538 = vmatpush1.bf16.msra.mxu0 0
        %539 = vmatprep.subr.bf16.mxu0 0
        %540 = vmatpush1.bf16.msra.mxu0 0
        %541 = vmatprep.subr.bf16.mxu0 0
        %542 = vmatpush1.bf16.msra.mxu0 0
        %543 = vmatprep.subr.bf16.mxu0 0
        %544 = vmatpush1.bf16.msra.mxu0 0
        %545 = vmatprep.subr.bf16.mxu0 0
        %546 = vmatpush1.bf16.msra.mxu0 0
        %547 = vmatprep.mubr.bf16.mxu0 0
        %548 = vmatmul.mubr.bf16.gmra.mrb[0].mxu0 %v513
        %v549 = vpop.f32.mrb[0].mxu0
        %v550 = vadd.f32 %v500, %v549
        %v551 = vpop.f32.mrb[0].mxu0
        %v552 = vpop.f32.mrb[0].mxu0
        %v553 = vadd.f32 %v505, %v552
        %v554 = vpop.f32.mrb[0].mxu0
        %555 = vdwg.mxu0
        %s556 = smul.u32 %s15, 128
        %s557 = sshra.s32 %s556, 7
        %s558 = sand.u32 %s556, 127
        %s559 = smul.addr %s557, 8
        %s560 = scalar_lea.vmem [#allocation2], %s559
        %561 = vst [vmem:[%s560] sm:$0xff] %v550
        %562 = vst [vmem:[%s560 + $0x10] sm:$0xff] %v553
        %p563 = scmp.eq.s32.totalorder %s15, 1
        // Predicated region
        $region33: #{tpu_custom_call.1} parent=31 // pred_check
          %p564 = pneg %p563
        $region34: #{tpu_custom_call.1} parent=31 // pred_check_branch
          %566 = sbr.rel (%p564) target = $region36
        $region35: #{tpu_custom_call.1} parent=31 // pred_region
          %v567 = vld [vmem:[#allocation2] sm:$0xff]
          %v568 = vld [vmem:[#allocation2 + $0x8] sm:$0xff]
          %v569 = vld [vmem:[#allocation2 + $0x10] sm:$0xff]
          %v570 = vld [vmem:[#allocation2 + $0x18] sm:$0xff]
          %v571 = vlaneseq
          %v572 = vand.u32 %v571, 127
          %v573 = vadd.s32 %v572, 128
          %vm574 = vcmp.lt.s32.totalorder %v572, 200
          %vm575 = vcmp.lt.s32.totalorder %v573, 200
          %v576 = vsel %vm574, %v567, -1e+30
          %v577 = vsel %vm575, %v568, -1e+30
          %v578 = vsel %vm574, %v569, -1e+30
          %v579 = vsel %vm575, %v570, -1e+30
          %v580 = vmax.f32 %v576, %v577
          %581 = vmax.xlane.f32.xlu0 %v580
          %v582 = vpop.xlane.xlu0 %581
          %v583 = vmax.f32 %v578, %v579
          %584 = vmax.xlane.f32.xlu0 %v583
          %v585 = vpop.xlane.xlu0 %584
          %v586 = vsub.f32 %v576, %v582
          %v587 = vsub.f32 %v577, %v582
          %v588 = vsub.f32 %v578, %v585
          %v589 = vsub.f32 %v579, %v585
          %v590 = vmul.f32 %v586, 1.442695
          %v591 = vpow.pop %v590
          %v592 = vmul.f32 %v587, 1.442695
          %v593 = vpow.pop %v592
          %v594 = vmul.f32 %v588, 1.442695
          %v595 = vpow.pop %v594
          %v596 = vmul.f32 %v589, 1.442695
          %v597 = vpow.pop %v596
          %v598 = vsel %vm574, %v591, 0.0
          %v599 = vsel %vm575, %v593, 0.0
          %v600 = vsel %vm574, %v595, 0.0
          %v601 = vsel %vm575, %v597, 0.0
          %v602 = vadd.f32 %v598, %v599
          %603 = vadd.xlane.f32.xlu0 %v602
          %v604 = vpop.xlane.xlu0 %603
          %v605 = vadd.f32 %v600, %v601
          %606 = vadd.xlane.f32.xlu0 %v605
          %v607 = vpop.xlane.xlu0 %606
          %v608 = vrcp.pop %v604
          %v609 = vmul.f32 %v598, %v608
          %v610 = vmul.f32 %v599, %v608
          %v611 = vrcp.pop %v607
          %v612 = vmul.f32 %v600, %v611
          %v613 = vmul.f32 %v601, %v611
          %v614 = vlaneseq
          %v615 = vshrl.u32 %v614, 7
          %v616 = vadd.s32 %v615, 8
          %vm617 = vcmp.lt.s32.totalorder %v615, 2
          %vm618 = vcmp.lt.s32.totalorder %v616, 2
          %v619 = vsel %vm617, %v609, 0.0
          %v620 = vsel %vm617, %v610, 0.0
          %v621 = vsel %vm618, %v612, 0.0
          %v622 = vsel %vm618, %v613, 0.0
          %623 = vst [vmem:[#allocation2] sm:$0xff] %v619
          %624 = vst [vmem:[#allocation2 + $0x8] sm:$0xff] %v620
          %625 = vst [vmem:[#allocation2 + $0x10] sm:$0xff] %v621
          %626 = vst [vmem:[#allocation2 + $0x18] sm:$0xff] %v622
        $region36: #{tpu_custom_call.1} parent=31 // pred_fallthru
          _
        // Predicated region
        $region37: #{tpu_custom_call.1} parent=31 // pred_check
          %p627 = pneg %p96
        $region38: #{tpu_custom_call.1} parent=31 // pred_check_branch
          %629 = sbr.rel (%p627) target = $region40
        $region39: #{tpu_custom_call.1} parent=31 // pred_region
          %s631 = ssub.s32 512, 512
          %632 = vsyncadd [#allocation3], %s631
          %s633 = sshll.u32 [#allocation2], 4
          %s634 = int_to_ptr.vmem [resolvable:$true] %s633
          %639 = dma.vmem_to_hbm [thread:$0]  %s634, 512, %s3, [#allocation3], 256, 256, 16
        $region40: #{tpu_custom_call.1} parent=31 // pred_fallthru
          _
        // Predicated region
        $region41: #{tpu_custom_call.1} parent=31 // pred_check
          %p640 = pneg %p96
        $region42: #{tpu_custom_call.1} parent=31 // pred_check_branch
          %642 = sbr.rel (%p640) target = $region44
        $region43: #{tpu_custom_call.1} parent=31 // pred_region
          %643 = dma.done [#allocation3], 512
        $region44: #{tpu_custom_call.1} parent=31 // pred_fallthru
          _
      $region32: #{tpu_custom_call.1} parent=5 // pred_fallthru
        _
      %p644 = scmp.le.s32.totalorder 2, %s10
      // Predicated region
      $region45: #{tpu_custom_call.1} parent=5 // pred_check
        %p645 = pneg %p644
      $region46: #{tpu_custom_call.1} parent=5 // pred_check_branch
        %647 = sbr.rel (%p645) target = $region48
      $region47: #{tpu_custom_call.1} parent=5 // pred_region
        %s648 = ssub.s32 %s10, 2
      $region48: #{tpu_custom_call.1} parent=5 // pred_fallthru
        _
    $region6: #{tpu_custom_call.1} parent=1 // loop_footer
      %s14 = sadd.s32 1, %s10
    $region7: #{tpu_custom_call.1} parent=1 // loop_footer_branch
      %9 = sbr.rel target = $region3
    $region8: #{tpu_custom_call.1} parent=1 // loop_exit
      _
    %649 = vsyncpa [#allocation3], 1
    %s650 = scalar_lea.sflag [#allocation3], 1
    %651 = vsyncpa %s650, 1

</llo_original>
